<compile_context>
chip_gen: v6e
topology: v6e:2x2x1
jax: 0.10.0
libtpu: 0.0.40
codegen_flags: <defaults>
</compile_context>

<pallas_src>
import math
import functools

import jax
import jax.numpy as jnp
from jax.experimental import pallas as pl
from jax.experimental.pallas import tpu as pltpu


# ------------------------------- helpers -------------------------------------

def _sublane_base(dtype):
    """Packed-sublane row granularity: 8 for f32, 16 for bf16, 32 for int8/fp8."""
    itemsize = jnp.dtype(dtype).itemsize
    return max(8, 32 // max(itemsize, 1))


def _pick_tile(dim, target, base):
    """Largest divisor of `dim` that is <= target and a multiple of `base`;
    falls back to the full dim (full-extent blocks are always legal)."""
    if dim <= target:
        return dim
    for t in range(target, base - 1, -1):
        if dim % t == 0 and t % base == 0:
            return t
    return dim


def _vmem_budget_bytes():
    """Per-generation scoped-VMEM budget (leave headroom for compiler scratch)."""
    cap = None
    try:
        cap = getattr(pltpu.get_tpu_info(), "vmem_capacity_bytes", None)
    except Exception:
        cap = None
    if not cap:
        cap = 64 * 1024 * 1024          # conservative (v7x per-TensorCore)
    return min(int(cap) * 3 // 4, 100 * 1024 * 1024)


_VMEM_LIMIT = _vmem_budget_bytes()
_BIG_VMEM = _VMEM_LIMIT >= 80 * 1024 * 1024   # v5e / v6e (128 MiB physical)


# ----------------------------- Pallas kernels ---------------------------------

def _matmul_kernel(x_ref, w_ref, o_ref, acc_ref):
    # Tiled matmul with f32 accumulator resident across the K axis.
    @pl.when(pl.program_id(2) == 0)
    def _init():
        acc_ref[...] = jnp.zeros(acc_ref.shape, acc_ref.dtype)

    acc_ref[...] += jnp.dot(
        x_ref[...], w_ref[...], preferred_element_type=jnp.float32
    )

    @pl.when(pl.program_id(2) == pl.num_programs(2) - 1)
    def _store():
        o_ref[...] = acc_ref[...].astype(o_ref.dtype)


def pallas_matmul(x, w, *, tm_target=256, tn_target=None, tk_target=None):
    """x: (M, K) @ w: (K, N) -> (M, N). Grid-tiled over (M, N, K)."""
    M, K = x.shape
    K2, N = w.shape
    assert K == K2
    if tn_target is None:
        tn_target = 512 if _BIG_VMEM else 256
    if tk_target is None:
        tk_target = 1024 if _BIG_VMEM else 512

    tm = _pick_tile(M, tm_target, _sublane_base(x.dtype))
    # tn a multiple of 256 when possible to fill the 256-wide MXU (v6e/v7x).
    tn = _pick_tile(N, tn_target, 256 if N % 256 == 0 else 128)
    tk = _pick_tile(K, tk_target, 128)
    grid = (M // tm, N // tn, K // tk)
    return pl.pallas_call(
        _matmul_kernel,
        out_shape=jax.ShapeDtypeStruct((M, N), x.dtype),
        grid=grid,
        in_specs=[
            pl.BlockSpec((tm, tk), lambda i, j, k: (i, k)),
            pl.BlockSpec((tk, tn), lambda i, j, k: (k, j)),
        ],
        out_specs=pl.BlockSpec((tm, tn), lambda i, j, k: (i, j)),
        scratch_shapes=[pltpu.VMEM((tm, tn), jnp.float32)],
        compiler_params=pltpu.CompilerParams(
            dimension_semantics=("parallel", "parallel", "arbitrary"),
            vmem_limit_bytes=_VMEM_LIMIT,
        ),
    )(x, w)


def _flash_attention_kernel(kv_len_ref, q_ref, k_ref, v_ref, o_ref,
                            qs_ref, m_ref, l_ref, acc_ref, *, scale, t_blk):
    # q_ref: (1, 1, qb, D) -- a q-block of the n_rep*S query rows for this KV head
    # k_ref / v_ref: (1, 1, t_blk, D); o_ref: (1, 1, qb, D)
    # kv_len_ref: (1,) int32 scalar-prefetch (true KV length; tail is masked)
    t = pl.program_id(3)

    @pl.when(t == 0)
    def _init():
        # Hoist the 1/sqrt(D) scale out of the KV loop: done once per (b, h, q-block).
        qs_ref[...] = (q_ref[0, 0].astype(jnp.float32) * scale).astype(qs_ref.dtype)
        m_ref[...] = jnp.full(m_ref.shape, -jnp.inf, m_ref.dtype)
        l_ref[...] = jnp.zeros(l_ref.shape, l_ref.dtype)
        acc_ref[...] = jnp.zeros(acc_ref.shape, acc_ref.dtype)

    q = qs_ref[...]                            # (qb, D), pre-scaled
    k = k_ref[0, 0]                            # (t_blk, D)
    v = v_ref[0, 0]                            # (t_blk, D)

    # scores: contract the D axes directly -> no K transpose (no XLU pass).
    s = jax.lax.dot_general(
        q, k, (((1,), (1,)), ((), ())),
        preferred_element_type=jnp.float32)    # (qb, t_blk) f32

    # Mask the padded tail (positions >= kv_len). Large-negative (not -inf) so the
    # online-softmax rescale never produces inf - inf = NaN.
    kv_len = kv_len_ref[0]
    pos = t * t_blk + jax.lax.broadcasted_iota(jnp.int32, s.shape, 1)
    s = jnp.where(pos < kv_len, s, -1e30)

    m_prev = m_ref[...]                        # (qb, 1)
    m_new = jnp.maximum(m_prev, jnp.max(s, axis=-1, keepdims=True))
    alpha = jnp.exp(m_prev - m_new)            # rescale factor for old partials
    p = jnp.exp(s - m_new)                     # (qb, t_blk) f32
    l_ref[...] = alpha * l_ref[...] + jnp.sum(p, axis=-1, keepdims=True)
    pv = jax.lax.dot_general(
        p.astype(v.dtype), v, (((1,), (0,)), ((), ())),
        preferred_element_type=jnp.float32)    # (qb, D)  (== scores.type_as(xq) @ v)
    acc_ref[...] = alpha * acc_ref[...] + pv
    m_ref[...] = m_new

    @pl.when(t == pl.num_programs(3) - 1)
    def _finalize():
        # Exact divide: runs once per q tile, so cost is negligible; keeps f32
        # validation tight. Use pl.reciprocal(approx=True) for bf16 production runs.
        o_ref[0, 0] = (acc_ref[...] / l_ref[...]).astype(o_ref.dtype)


def pallas_attention(q_g, keys, values, kv_len, *, t_blk, q_block_target=256):
    """q_g: (B, Hkv, n_rep*S, D); keys/values: (B, Hkv, T_pad, D), T_pad % t_blk == 0;
    kv_len: (1,) int32 true KV length (tail beyond it is masked in-kernel).
    Returns (B, Hkv, n_rep*S, D)."""
    B, Hkv, RS, D = q_g.shape
    _, _, T_pad, _ = keys.shape
    assert T_pad % t_blk == 0
    scale = 1.0 / math.sqrt(D)

    qb = _pick_tile(RS, q_block_target, _sublane_base(q_g.dtype))
    n_q = RS // qb
    n_t = T_pad // t_blk

    kernel = functools.partial(_flash_attention_kernel, scale=scale, t_blk=t_blk)

    # TODO(synk): for v7x decode with B*Hkv < 2, add a split-KV (flash-decoding)
    # variant so both TensorCores share the KV sweep.
    return pl.pallas_call(
        kernel,
        out_shape=jax.ShapeDtypeStruct((B, Hkv, RS, D), q_g.dtype),
        grid_spec=pltpu.PrefetchScalarGridSpec(
            num_scalar_prefetch=1,
            grid=(B, Hkv, n_q, n_t),
            in_specs=[
                pl.BlockSpec((1, 1, qb, D), lambda b, h, qi, t, kvl: (b, h, qi, 0)),
                pl.BlockSpec((1, 1, t_blk, D), lambda b, h, qi, t, kvl: (b, h, t, 0)),
                pl.BlockSpec((1, 1, t_blk, D), lambda b, h, qi, t, kvl: (b, h, t, 0)),
            ],
            out_specs=pl.BlockSpec((1, 1, qb, D), lambda b, h, qi, t, kvl: (b, h, qi, 0)),
            scratch_shapes=[
                pltpu.VMEM((qb, D), q_g.dtype),     # pre-scaled q (hoisted out of T loop)
                pltpu.VMEM((qb, 1), jnp.float32),   # m (running max)
                pltpu.VMEM((qb, 1), jnp.float32),   # l (running denom)
                pltpu.VMEM((qb, D), jnp.float32),   # acc (unnormalized output)
            ]),
        compiler_params=pltpu.CompilerParams(
            dimension_semantics=("parallel", "parallel", "parallel", "arbitrary"),
            vmem_limit_bytes=_VMEM_LIMIT,
        ),
    )(kv_len, q_g, keys, values)


# ------------------------------- JAX glue -------------------------------------

def apply_rotary_embeddings(x, cos, sin):
    """Interleaved-pair complex rotation, matching torch.view_as_complex semantics.

    x: (B, S, H, D); cos, sin: (S, D//2) — real/imag parts of freqs_complex.
    """
    B, S, H, D = x.shape
    xr = x.astype(jnp.float32).reshape(B, S, H, D // 2, 2)
    x0 = xr[..., 0]
    x1 = xr[..., 1]
    c = cos[None, :, None, :]
    s = sin[None, :, None, :]
    o0 = x0 * c - x1 * s
    o1 = x0 * s + x1 * c
    out = jnp.stack([o0, o1], axis=-1).reshape(B, S, H, D)
    return out.astype(x.dtype)


def make_params(wq, wk, wv, wo):
    """Precompute the fused QKV weight ONCE at init (not per forward step)."""
    return {
        "wq": wq, "wk": wk, "wv": wv, "wo": wo,
        "w_qkv": jnp.concatenate([wq, wk, wv], axis=1),
    }


def self_attention_forward(params, cache_k, cache_v, x, start_pos, cos, sin,
                           n_heads, n_kv_heads, *, t_block_target=1024):
    """Reproduces SelfAttention.forward. Returns (output, new_cache_k, new_cache_v).

    Cache layout is head-major: (max_B, Hkv, max_T, D), so attention reads it without
    transposing the whole cache each step.  start_pos is a static Python int, but the
    attention kernel itself compiles against a KV extent padded to a fixed multiple of
    the KV block (true length handled via scalar-prefetch mask), so decode steps with
    different start_pos reuse the same kernel for a given padded extent.
    """
    B, S, dim = x.shape
    head_dim = dim // n_heads
    n_rep = n_heads // n_kv_heads
    nq = n_heads * head_dim
    nk = n_kv_heads * head_dim
    max_T = cache_k.shape[2]

    # --- fused QKV projection: read x from HBM once, fused weight precomputed ---
    x2d = x.reshape(B * S, dim)
    qkv = pallas_matmul(x2d, params["w_qkv"])                 # (B*S, nq + 2*nk)
    xq = qkv[:, :nq].reshape(B, S, n_heads, head_dim)
    xk = qkv[:, nq:nq + nk].reshape(B, S, n_kv_heads, head_dim)
    xv = qkv[:, nq + nk:].reshape(B, S, n_kv_heads, head_dim)

    # --- RoPE (cheap, O(B*S*H*D) glue) ---
    xq = apply_rotary_embeddings(xq, cos, sin)
    xk = apply_rotary_embeddings(xk, cos, sin)

    # --- KV cache update: only the new S tokens are transposed, not the cache ---
    xk_h = jnp.transpose(xk, (0, 2, 1, 3))                    # (B, Hkv, S, D)
    xv_h = jnp.transpose(xv, (0, 2, 1, 3))
    cache_k = jax.lax.dynamic_update_slice(cache_k, xk_h, (0, 0, start_pos, 0))
    cache_v = jax.lax.dynamic_update_slice(cache_v, xv_h, (0, 0, start_pos, 0))

    # --- fixed-tiled KV extent: pad T up to a multiple of t_blk; mask tail in-kernel ---
    T = start_pos + S
    t_blk = _pick_tile(max_T, t_block_target, 8)              # divides max_T
    T_pad = t_blk * ((T + t_blk - 1) // t_blk)                # <= max_T
    keys = cache_k[:B, :, :T_pad]                             # (B, Hkv, T_pad, D)
    values = cache_v[:B, :, :T_pad]
    kv_len = jnp.array([T], dtype=jnp.int32)

    # --- group the n_rep query heads of each KV head into one (n_rep*S, D) slab ---
    q_h = jnp.transpose(xq, (0, 2, 1, 3))                     # (B, Hq, S, D)
    q_g = q_h.reshape(B, n_kv_heads, n_rep * S, head_dim)     # (B, Hkv, R*S, D)

    out_g = pallas_attention(q_g, keys, values, kv_len, t_blk=t_blk)

    # TODO(synk): fold this head-relayout into the wo matmul's in_spec index_map to
    # avoid one extra HBM pass over the attention output.
    out = out_g.reshape(B, n_kv_heads, n_rep, S, head_dim)
    out = jnp.transpose(out, (0, 3, 1, 2, 4)).reshape(B, S, n_heads * head_dim)

    out = pallas_matmul(out.reshape(B * S, -1), params["wo"]).reshape(B, S, dim)
    return out, cache_k, cache_v


# ------------------------------ reference -------------------------------------

def reference_forward(params, cache_k, cache_v, x, start_pos, cos, sin,
                      n_heads, n_kv_heads):
    """Pure-JAX reference with the PyTorch module's cache layout (B, T, Hkv, D)."""
    B, S, dim = x.shape
    head_dim = dim // n_heads
    n_rep = n_heads // n_kv_heads

    xq = (x.reshape(B * S, dim) @ params["wq"]).reshape(B, S, n_heads, head_dim)
    xk = (x.reshape(B * S, dim) @ params["wk"]).reshape(B, S, n_kv_heads, head_dim)
    xv = (x.reshape(B * S, dim) @ params["wv"]).reshape(B, S, n_kv_heads, head_dim)

    xq = apply_rotary_embeddings(xq, cos, sin)
    xk = apply_rotary_embeddings(xk, cos, sin)

    cache_k = jax.lax.dynamic_update_slice(cache_k, xk, (0, start_pos, 0, 0))
    cache_v = jax.lax.dynamic_update_slice(cache_v, xv, (0, start_pos, 0, 0))
    T = start_pos + S
    keys = jnp.repeat(cache_k[:B, :T], n_rep, axis=2)    # repeat_kv
    values = jnp.repeat(cache_v[:B, :T], n_rep, axis=2)

    q = jnp.transpose(xq, (0, 2, 1, 3))
    k = jnp.transpose(keys, (0, 2, 1, 3))
    v = jnp.transpose(values, (0, 2, 1, 3))
    scores = jnp.einsum("bhsd,bhtd->bhst", q, k) / math.sqrt(head_dim)
    scores = jax.nn.softmax(scores.astype(jnp.float32), axis=-1).astype(q.dtype)
    out = jnp.einsum("bhst,bhtd->bhsd", scores, v)
    out = jnp.transpose(out, (0, 2, 1, 3)).reshape(B, S, -1)
    return out @ params["wo"]


# --------------------------------- main ----------------------------------------

if __name__ == "__main__":
    # Small ModelArgs-consistent shapes.
    B = 2
    S = 8
    dim = 32
    n_heads = 4
    n_kv_heads = 2
    head_dim = dim // n_heads          # 8
    max_batch_size = 2
    max_seq_len = 16
    start_pos = 4

    key = jax.random.PRNGKey(0)
    kx, kq, kk, kv, ko = jax.random.split(key, 5)

    x = jax.random.normal(kx, (B, S, dim), dtype=jnp.float32)

    # Linear weights stored as (in, out) so kernels compute x @ W (== torch x @ W.T).
    scale = 1.0 / math.sqrt(dim)
    wq = jax.random.uniform(kq, (dim, n_heads * head_dim), jnp.float32, -scale, scale)
    wk = jax.random.uniform(kk, (dim, n_kv_heads * head_dim), jnp.float32, -scale, scale)
    wv = jax.random.uniform(kv, (dim, n_kv_heads * head_dim), jnp.float32, -scale, scale)
    wo = jax.random.uniform(ko, (n_heads * head_dim, dim), jnp.float32, -scale, scale)
    params = make_params(wq, wk, wv, wo)    # fused QKV weight precomputed once at init

    # Zero-initialized KV caches.
    #   Pallas path: head-major (max_B, Hkv, max_T, D).
    #   Reference:   PyTorch layout (max_B, max_T, Hkv, D).
    cache_k = jnp.zeros((max_batch_size, n_kv_heads, max_seq_len, head_dim), jnp.float32)
    cache_v = jnp.zeros((max_batch_size, n_kv_heads, max_seq_len, head_dim), jnp.float32)
    ref_cache_k = jnp.zeros((max_batch_size, max_seq_len, n_kv_heads, head_dim), jnp.float32)
    ref_cache_v = jnp.zeros((max_batch_size, max_seq_len, n_kv_heads, head_dim), jnp.float32)

    # freqs_complex for positions [start_pos, start_pos + S) -> cos/sin of shape (S, D//2).
    inv_freq = 1.0 / (10000.0 ** (jnp.arange(0, head_dim, 2, dtype=jnp.float32) / head_dim))
    positions = jnp.arange(start_pos, start_pos + S, dtype=jnp.float32)
    freqs = jnp.outer(positions, inv_freq)           # (S, D//2)
    cos, sin = jnp.cos(freqs), jnp.sin(freqs)

    out, new_ck, new_cv = self_attention_forward(
        params, cache_k, cache_v, x, start_pos, cos, sin, n_heads, n_kv_heads
    )
    out = jax.block_until_ready(out)

    ref = reference_forward(
        params, ref_cache_k, ref_cache_v, x, start_pos, cos, sin, n_heads, n_kv_heads
    )
    assert out.shape == (B, S, dim)
    assert jnp.allclose(out, ref, rtol=1e-2, atol=1e-2), "mismatch vs JAX reference"

    print("KERNEL_OK")
</pallas_src>

<mosaic_0001>
module attributes {stable_mosaic.version = 11 : i64} {
  func.func @_matmul_kernel(%arg0: i32, %arg1: i32, %arg2: i32, %arg3: memref<16x32xf32, #tpu.memory_space<vmem>>, %arg4: memref<32x64xf32, #tpu.memory_space<vmem>>, %arg5: memref<16x64xf32, #tpu.memory_space<vmem>>, %arg6: memref<16x64xf32, #tpu.memory_space<vmem>>) attributes {dimension_semantics = [#tpu.dimension_semantics<parallel>, #tpu.dimension_semantics<parallel>, #tpu.dimension_semantics<arbitrary>], iteration_bounds = array<i64: 1, 1, 1>, scalar_prefetch = 0 : i64, scratch_operands = 1 : i64, tpu.core_type = #tpu.core_type<tc>, window_params = [{transform_indices = @transform_0, window_bounds = array<i64: 16, 32>}, {transform_indices = @transform_1, window_bounds = array<i64: 32, 64>}, {transform_indices = @transform_2, window_bounds = array<i64: 16, 64>}]} {
    %c0_i32 = arith.constant 0 : i32
    %0 = arith.cmpi eq, %arg2, %c0_i32 : i32
    %1 = arith.extui %0 : i1 to i32
    %c0_i32_0 = arith.constant 0 : i32
    %2 = arith.cmpi ne, %1, %c0_i32_0 : i32
    scf.if %2 {
      %cst_10 = arith.constant 0.000000e+00 : f32
      %12 = vector.broadcast %cst_10 : f32 to vector<16x64xf32>
      %c0_11 = arith.constant 0 : index
      %c0_12 = arith.constant 0 : index
      %13 = vector.load %arg6[%c0_11, %c0_12] : memref<16x64xf32, #tpu.memory_space<vmem>>, vector<16x64xf32>
      tpu.vector_store %arg6[%c0_11, %c0_12], %12 {strides = array<i32>} : memref<16x64xf32, #tpu.memory_space<vmem>>, vector<16x64xf32>,
    } else {
    }
    %c0 = arith.constant 0 : index
    %c0_1 = arith.constant 0 : index
    %3 = vector.load %arg6[%c0, %c0_1] : memref<16x64xf32, #tpu.memory_space<vmem>>, vector<16x64xf32>
    %c0_2 = arith.constant 0 : index
    %c0_3 = arith.constant 0 : index
    %4 = vector.load %arg3[%c0_2, %c0_3] : memref<16x32xf32, #tpu.memory_space<vmem>>, vector<16x32xf32>
    %c0_4 = arith.constant 0 : index
    %c0_5 = arith.constant 0 : index
    %5 = vector.load %arg4[%c0_4, %c0_5] : memref<32x64xf32, #tpu.memory_space<vmem>>, vector<32x64xf32>
    %cst = arith.constant dense<0.000000e+00> : vector<16x64xf32>
    %6 = tpu.matmul %4, %5, %cst {dimension_numbers = #tpu.dot_dimension_numbers<[1], [0], [0], [1], [0, 0, 1, 1], [], []>} : vector<16x32xf32>, vector<32x64xf32>, vector<16x64xf32> -> vector<16x64xf32>
    %7 = arith.addf %3, %6 : vector<16x64xf32>
    %c0_6 = arith.constant 0 : index
    %c0_7 = arith.constant 0 : index
    %8 = vector.load %arg6[%c0_6, %c0_7] : memref<16x64xf32, #tpu.memory_space<vmem>>, vector<16x64xf32>
    tpu.vector_store %arg6[%c0_6, %c0_7], %7 {strides = array<i32>} : memref<16x64xf32, #tpu.memory_space<vmem>>, vector<16x64xf32>,
    %c0_i32_8 = arith.constant 0 : i32
    %9 = arith.cmpi eq, %arg2, %c0_i32_8 : i32
    %10 = arith.extui %9 : i1 to i32
    %c0_i32_9 = arith.constant 0 : i32
    %11 = arith.cmpi ne, %10, %c0_i32_9 : i32
    scf.if %11 {
      %c0_10 = arith.constant 0 : index
      %c0_11 = arith.constant 0 : index
      %12 = vector.load %arg6[%c0_10, %c0_11] : memref<16x64xf32, #tpu.memory_space<vmem>>, vector<16x64xf32>
      %c0_12 = arith.constant 0 : index
      %c0_13 = arith.constant 0 : index
      %13 = vector.load %arg5[%c0_12, %c0_13] : memref<16x64xf32, #tpu.memory_space<vmem>>, vector<16x64xf32>
      tpu.vector_store %arg5[%c0_12, %c0_13], %12 {strides = array<i32>} : memref<16x64xf32, #tpu.memory_space<vmem>>, vector<16x64xf32>,
    } else {
    }
    return
  }
  func.func @transform_0(%arg0: i32, %arg1: i32, %arg2: i32) -> (i32, i32) {
    %c0_i32 = arith.constant 0 : i32
    return %arg0, %arg2 : i32, i32
  }
  func.func @transform_1(%arg0: i32, %arg1: i32, %arg2: i32) -> (i32, i32) {
    %c0_i32 = arith.constant 0 : i32
    return %arg2, %arg1 : i32, i32
  }
  func.func @transform_2(%arg0: i32, %arg1: i32, %arg2: i32) -> (i32, i32) {
    %c0_i32 = arith.constant 0 : i32
    return %arg0, %arg1 : i32, i32
  }
}

</mosaic_0001>

<llo_original>
// kernel: tpu_custom_call.1
$region0: #{tpu_custom_call.1}
  #allocation0 [shape = 'u32[]', space=smem, size = 0x4, offset = 0x4, fixed_abs, tag = 'smem constant byte address 0x4 - core index']
  #allocation1 [shape = 'u32[144,128]{1,0:T(1,128)}', space=vmem, size = 0x12000, scoped, tag = 'internal scratch']
  #allocation2 [shape = 'f32[16,64]{1,0:T(8,128)}', space=vmem, size = 0x2000, scoped, tag = 'scratch operand']
  %s0 = inlined_call_operand.hbm [shape: f32[16,32], index: 0, kind: input, shape index: {}]
  %s1 = inlined_call_operand.hbm [shape: f32[32,64], index: 1, kind: input, shape index: {}]
  %s2 = inlined_call_operand.hbm [shape: f32[16,64], index: 2, kind: output, shape index: {}]
  %s3 = sld [smem:[#allocation0]]
  $region34: #{tpu_custom_call.1} parent=0
    _
  %s5 = ssub.s32 1, %s3
  %s6 = scalar_select 0, %s5, %s3
  $region1: #{tpu_custom_call.1} parent=0
    #allocation3 [shape = 'u8[8192]{0}', space=vmem, size = 0x2000, scoped, tag = 'input window, operand 0, single buffered']
    #allocation4 [shape = 's32[1]{0}', space=sflag, size = 0x4, scoped, tag = 'scoped memory for tpu_custom_call.1']
    #allocation5 [shape = 's32[1]{0}', space=sflag, size = 0x4, scoped, tag = 'scoped memory for tpu_custom_call.1']
    #allocation6 [shape = 'u8[16384]{0}', space=vmem, size = 0x4000, scoped, tag = 'input window, operand 1, single buffered']
    #allocation7 [shape = 's32[1]{0}', space=sflag, size = 0x4, scoped, tag = 'scoped memory for tpu_custom_call.1']
    #allocation8 [shape = 'u8[8192]{0}', space=vmem, size = 0x2000, scoped, tag = 'output window, operand 0, single buffered']
    %7 = vsyncpa [#allocation4], 0
    %8 = vsyncpa [#allocation7], 0
    %9 = vsyncpa [#allocation5], 0
    // Predicated region
    $region2: #{tpu_custom_call.1} parent=1 // pred_check
      _
    $region3: #{tpu_custom_call.1} parent=1 // pred_check_branch
      %11 = sbr.rel (0) target = $region5
    $region4: #{tpu_custom_call.1} parent=1 // pred_region
      %s13 = ssub.s32 256, 256
      %14 = vsyncadd [#allocation4], %s13
      %s15 = sshll.u32 [#allocation3], 4
      %s16 = int_to_ptr.vmem [resolvable:$true] %s15
      %21 = dma.hbm_to_vmem [thread:$0]  %s0, 256, %s16, [#allocation4], 128, 128, 8
    $region5: #{tpu_custom_call.1} parent=1 // pred_fallthru
      _
    // Predicated region
    $region6: #{tpu_custom_call.1} parent=1 // pred_check
      _
    $region7: #{tpu_custom_call.1} parent=1 // pred_check_branch
      %23 = sbr.rel (0) target = $region9
    $region8: #{tpu_custom_call.1} parent=1 // pred_region
      %s25 = ssub.s32 512, 512
      %26 = vsyncadd [#allocation7], %s25
      %s27 = sshll.u32 [#allocation6], 4
      %s28 = int_to_ptr.vmem [resolvable:$true] %s27
      %33 = dma.hbm_to_vmem [thread:$0]  %s1, 512, %s28, [#allocation7], 128, 128, 8
    $region9: #{tpu_custom_call.1} parent=1 // pred_fallthru
      _
    // Predicated region
    $region10: #{tpu_custom_call.1} parent=1 // pred_check
      _
    $region11: #{tpu_custom_call.1} parent=1 // pred_check_branch
      %35 = sbr.rel (0) target = $region13
    $region12: #{tpu_custom_call.1} parent=1 // pred_region
      %36 = dma.done [#allocation4], 256
    $region13: #{tpu_custom_call.1} parent=1 // pred_fallthru
      _
    // Predicated region
    $region14: #{tpu_custom_call.1} parent=1 // pred_check
      _
    $region15: #{tpu_custom_call.1} parent=1 // pred_check_branch
      %38 = sbr.rel (0) target = $region17
    $region16: #{tpu_custom_call.1} parent=1 // pred_region
      %39 = dma.done [#allocation7], 512
    $region17: #{tpu_custom_call.1} parent=1 // pred_fallthru
      _
    %p40 = scmp.eq.s32.totalorder 0, 0
    // Predicated region
    $region18: #{tpu_custom_call.1} parent=1 // pred_check
      %p41 = pneg %p40
    $region19: #{tpu_custom_call.1} parent=1 // pred_check_branch
      %43 = sbr.rel (%p41) target = $region21
    $region20: #{tpu_custom_call.1} parent=1 // pred_region
      %vm44 = vcmask 523264
      %45 = vst.msk [vmem:[#allocation2] sm:$0xff] %vm44, 0.0
      %46 = vst.msk [vmem:[#allocation2 + $0x8] sm:$0xff] %vm44, 0.0
    $region21: #{tpu_custom_call.1} parent=1 // pred_fallthru
      _
    %v47 = vld [vmem:[#allocation2] sm:$0xff]
    %v48 = vld [vmem:[#allocation2 + $0x8] sm:$0xff]
    %v49 = vld [vmem:[#allocation3] sm:$0xff]
    %v50 = vld [vmem:[#allocation3 + $0x8] sm:$0xff]
    %v51 = vld [vmem:[#allocation6] sm:$0xff]
    %v52 = vld [vmem:[#allocation6 + $0x8] sm:$0xff]
    %v53 = vld [vmem:[#allocation6 + $0x10] sm:$0xff]
    %v54 = vld [vmem:[#allocation6 + $0x18] sm:$0xff]
    %vm55 = vcmask 261120
    %v57 = vsel %vm55, %v49, 0
    %v60 = vsel %vm55, %v50, 0
    %62 = vmatprep.subr.mxu0 0.0
    %63 = vmatpush1.msra.mxu0 0.0
    %64 = vmatprep.subr.mxu0 0.0
    %65 = vmatpush1.msra.mxu0 0.0
    %66 = vmatprep.subr.mxu0 0.0
    %67 = vmatpush1.msra.mxu0 0.0
    %68 = vmatprep.subr.mxu0 0.0
    %69 = vmatpush1.msra.mxu0 0.0
    %70 = vmatprep.subr.mxu0 0.0
    %71 = vmatpush1.msra.mxu0 0.0
    %72 = vmatprep.subr.mxu0 0.0
    %73 = vmatpush1.msra.mxu0 0.0
    %74 = vmatprep.subr.mxu0 0.0
    %75 = vmatpush1.msra.mxu0 0.0
    %76 = vmatprep.subr.mxu0 0.0
    %77 = vmatpush1.msra.mxu0 0.0
    %78 = vmatprep.subr.mxu0 0.0
    %79 = vmatpush1.msra.mxu0 0.0
    %80 = vmatprep.subr.mxu0 0.0
    %81 = vmatpush1.msra.mxu0 0.0
    %82 = vmatprep.subr.mxu0 0.0
    %83 = vmatpush1.msra.mxu0 0.0
    %84 = vmatprep.subr.mxu0 0.0
    %85 = vmatpush1.msra.mxu0 0.0
    %86 = vmatprep.subr.mxu0 0.0
    %87 = vmatpush1.msra.mxu0 %v54
    %88 = vmatprep.subr.mxu0 0.0
    %89 = vmatpush1.msra.mxu0 %v53
    %90 = vmatprep.subr.mxu0 0.0
    %91 = vmatpush1.msra.mxu0 %v52
    %92 = vmatprep.subr.mxu0 0.0
    %93 = vmatpush1.msra.mxu0 %v51
    %94 = vmatprep.subr.mxu0 0.0
    %95 = vmatpush2.msra.mxu0 0.0
    %96 = vmatprep.subr.mxu0 0.0
    %97 = vmatpush2.msra.mxu0 0.0
    %98 = vmatprep.subr.mxu0 0.0
    %99 = vmatpush2.msra.mxu0 0.0
    %100 = vmatprep.subr.mxu0 0.0
    %101 = vmatpush2.msra.mxu0 0.0
    %102 = vmatprep.subr.mxu0 0.0
    %103 = vmatpush2.msra.mxu0 0.0
    %104 = vmatprep.subr.mxu0 0.0
    %105 = vmatpush2.msra.mxu0 0.0
    %106 = vmatprep.subr.mxu0 0.0
    %107 = vmatpush2.msra.mxu0 0.0
    %108 = vmatprep.subr.mxu0 0.0
    %109 = vmatpush2.msra.mxu0 0.0
    %110 = vmatprep.subr.mxu0 0.0
    %111 = vmatpush2.msra.mxu0 0.0
    %112 = vmatprep.subr.mxu0 0.0
    %113 = vmatpush2.msra.mxu0 0.0
    %114 = vmatprep.subr.mxu0 0.0
    %115 = vmatpush2.msra.mxu0 0.0
    %116 = vmatprep.subr.mxu0 0.0
    %117 = vmatpush2.msra.mxu0 0.0
    %118 = vmatprep.subr.mxu0 0.0
    %119 = vmatpush2.msra.mxu0 0.0
    %120 = vmatprep.subr.mxu0 0.0
    %121 = vmatpush2.msra.mxu0 0.0
    %122 = vmatprep.subr.mxu0 0.0
    %123 = vmatpush2.msra.mxu0 0.0
    %124 = vmatprep.subr.mxu0 0.0
    %125 = vmatpush2.msra.mxu0 0.0
    %126 = vmatprep.mubr.f32.mxu0 0.0
    %127 = vmatmul.mubr.f32.gmra.mxu0 %v57
    %v128 = vpop.f32.mrf.mxu0
    %v129 = vadd.f32 0.0, %v128
    %v130 = vpop.f32.mrf.mxu0
    %131 = vmatprep.mubr.f32.mxu0 0.0
    %132 = vmatmul.mubr.f32.gmra.mxu0 %v60
    %v133 = vpop.f32.mrf.mxu0
    %v134 = vadd.f32 0.0, %v133
    %v135 = vpop.f32.mrf.mxu0
    %136 = vdwg.mxu0
    %v137 = vadd.f32 %v47, %v129
    %v138 = vadd.f32 %v48, %v134
    %vm139 = vcmask 523264
    %140 = vst.msk [vmem:[#allocation2] sm:$0xff] %vm139, %v137
    %141 = vst.msk [vmem:[#allocation2 + $0x8] sm:$0xff] %vm139, %v138
    // Predicated region
    $region22: #{tpu_custom_call.1} parent=1 // pred_check
      %p142 = pneg %p40
    $region23: #{tpu_custom_call.1} parent=1 // pred_check_branch
      %144 = sbr.rel (%p142) target = $region25
    $region24: #{tpu_custom_call.1} parent=1 // pred_region
      %v145 = vld [vmem:[#allocation2] sm:$0xff]
      %v146 = vld [vmem:[#allocation2 + $0x8] sm:$0xff]
      %147 = vst.msk [vmem:[#allocation8] sm:$0xff] %vm139, %v145
      %148 = vst.msk [vmem:[#allocation8 + $0x8] sm:$0xff] %vm139, %v146
    $region25: #{tpu_custom_call.1} parent=1 // pred_fallthru
      _
    // Predicated region
    $region26: #{tpu_custom_call.1} parent=1 // pred_check
      _
    $region27: #{tpu_custom_call.1} parent=1 // pred_check_branch
      %150 = sbr.rel (0) target = $region29
    $region28: #{tpu_custom_call.1} parent=1 // pred_region
      %s152 = ssub.s32 256, 256
      %153 = vsyncadd [#allocation5], %s152
      %s154 = sshll.u32 [#allocation8], 4
      %s155 = int_to_ptr.vmem [resolvable:$true] %s154
      %160 = dma.vmem_to_hbm [thread:$0]  %s155, 256, %s2, [#allocation5], 128, 128, 8
    $region29: #{tpu_custom_call.1} parent=1 // pred_fallthru
      _
    // Predicated region
    $region30: #{tpu_custom_call.1} parent=1 // pred_check
      _
    $region31: #{tpu_custom_call.1} parent=1 // pred_check_branch
      %162 = sbr.rel (0) target = $region33
    $region32: #{tpu_custom_call.1} parent=1 // pred_region
      %163 = dma.done [#allocation5], 256
    $region33: #{tpu_custom_call.1} parent=1 // pred_fallthru
      _
    %164 = vsyncpa [#allocation4], 1
    %165 = vsyncpa [#allocation7], 1
    %166 = vsyncpa [#allocation5], 1

</llo_original>
